<compile_context>
chip_gen: v7x
topology: tpu7x:2x2x1
jax: 0.10.0
libtpu: 0.0.40
codegen_flags: <defaults>
</compile_context>

<pallas_src>
import functools
import math

import jax
import jax.numpy as jnp
from jax import lax
from jax.experimental import pallas as pl
from jax.experimental.pallas import tpu as pltpu


def _pick_tile(dim, target, align=128):
    """Largest divisor of `dim` that is <= target AND a multiple of `align`.

    Falls back to the full dim (always a legal block) when no aligned divisor
    exists, so BlockSpecs stay exact and (8,128)-legal."""
    if dim <= target:
        return dim
    for t in range(min(target, dim), 0, -1):
        if dim % t == 0 and t % align == 0:
            return t
    return dim


def _vmem_limit_bytes():
    """Generation-aware scoped-VMEM limit (~96 MiB on 128-MiB parts, ~48 MiB on v7x)."""
    try:
        cap = int(pltpu.get_tpu_info().vmem_capacity_bytes)
        return min(cap * 3 // 4, 96 * 1024 * 1024)
    except Exception:
        return 48 * 1024 * 1024


# ------------------------------ tiled linear ---------------------------------
def _linear_kernel(x_ref, w_ref, b_ref, o_ref, acc_ref):
    k = pl.program_id(2)

    @pl.when(k == 0)
    def _():
        acc_ref[...] = jnp.zeros_like(acc_ref)

    acc_ref[...] += jnp.dot(x_ref[...], w_ref[...],
                            preferred_element_type=jnp.float32)

    @pl.when(k == pl.num_programs(2) - 1)
    def _():
        o_ref[...] = (acc_ref[...] + b_ref[...]).astype(o_ref.dtype)


def pallas_linear(x, w, bias, out_dtype=jnp.float32, *,
                  tm_target=256, tn_target=512, tk_target=1024):
    """x: [M, K], w: [K, N], bias: [N] -> [M, N]. bf16 MXU operands, f32 acc."""
    M, K = x.shape
    Kw, N = w.shape
    assert K == Kw
    tm = _pick_tile(M, tm_target)
    tn = _pick_tile(N, tn_target)
    tk = _pick_tile(K, tk_target)

    x = x.astype(jnp.bfloat16)
    w = w.astype(jnp.bfloat16)
    b2 = bias.reshape(1, N).astype(jnp.float32)

    return pl.pallas_call(
        _linear_kernel,
        out_shape=jax.ShapeDtypeStruct((M, N), out_dtype),
        grid=(M // tm, N // tn, K // tk),
        in_specs=[
            pl.BlockSpec((tm, tk), lambda i, j, k: (i, k)),
            pl.BlockSpec((tk, tn), lambda i, j, k: (k, j)),
            pl.BlockSpec((1, tn), lambda i, j, k: (0, j)),
        ],
        out_specs=pl.BlockSpec((tm, tn), lambda i, j, k: (i, j)),
        scratch_shapes=[pltpu.VMEM((tm, tn), jnp.float32)],
        compiler_params=pltpu.CompilerParams(
            dimension_semantics=("parallel", "parallel", "arbitrary"),
            vmem_limit_bytes=_vmem_limit_bytes(),
        ),
    )(x, w, b2)


# ------------------------ flash-style attention core -------------------------
def _flash_attn_kernel(*refs, num_heads, tq, tkv, causal):
    if causal:
        (q_ref, k_ref, v_ref, o_ref, m_sc, l_sc, acc_sc) = refs
        mask_ref = None
    else:
        (mask_ref, q_ref, k_ref, v_ref, o_ref, m_sc, l_sc, acc_sc) = refs

    qi = pl.program_id(1)
    ki = pl.program_id(2)

    @pl.when(ki == 0)
    def _():
        m_sc[...] = jnp.full(m_sc.shape, -1e30, dtype=jnp.float32)
        l_sc[...] = jnp.zeros(l_sc.shape, dtype=jnp.float32)
        acc_sc[...] = jnp.zeros(acc_sc.shape, dtype=jnp.float32)

    def compute():
        if causal:
            # In-kernel causal mask: no [b,1,s,s] bias in HBM at all.
            row = qi * tq + lax.broadcasted_iota(jnp.int32, (tq, tkv), 0)
            col = ki * tkv + lax.broadcasted_iota(jnp.int32, (tq, tkv), 1)
            masked = col > row
        else:
            masked = mask_ref[...] > 0.5          # bf16 0/1 mask, shared by heads

        # Heads stay a static loop: all per-head slices/indices are static
        # (sublane index on the nh axis), which Mosaic lowers robustly; the
        # per-head running state lives in VMEM scratch, bounding live ranges.
        for h in range(num_heads):
            q = q_ref[:, h, :]                    # [tq,  dh] (1/sqrt(dh) pre-folded)
            k = k_ref[:, h, :]                    # [tkv, dh]
            v = v_ref[:, h, :]                    # [tkv, dh]

            s = lax.dot_general(q, k, (((1,), (1,)), ((), ())),     # q @ k^T
                                preferred_element_type=jnp.float32)  # [tq, tkv] f32
            s = jnp.where(masked, -10000.0, s)    # exact masked_fill(-10000), f32

            m_prev = m_sc[h]                      # [tq, 1]
            m_new = jnp.maximum(m_prev, jnp.max(s, axis=-1, keepdims=True))
            alpha = jnp.exp(m_prev - m_new)
            p = jnp.exp(s - m_new)                # [tq, tkv] f32

            l_sc[h] = alpha * l_sc[h] + jnp.sum(p, axis=-1, keepdims=True)
            acc_sc[h] = alpha * acc_sc[h] + jnp.dot(
                p.astype(v.dtype), v, preferred_element_type=jnp.float32)
            m_sc[h] = m_new

    if causal:
        # Skip kv tiles that lie entirely above the diagonal for this q tile.
        last_needed = ((qi + 1) * tq - 1) // tkv
        pl.when(ki <= last_needed)(compute)
    else:
        compute()

    @pl.when(ki == pl.num_programs(2) - 1)
    def _():
        for h in range(num_heads):
            inv_l = pl.reciprocal(l_sc[h], approx=True)             # EUP slot
            o_ref[:, h, :] = (acc_sc[h] * inv_l).astype(o_ref.dtype)


def pallas_flash_attention(qkv, attention_mask=None, *,
                           causal=False, q_tile=512, kv_tile=256):
    """qkv: [s, b, 3, nh, dh] (q|k|v slabs, softmax scale folded into q).
    attention_mask: bool [b, 1, s, s] (True == masked); ignored when causal.
    Returns context [s, b, nh, dh] in bf16."""
    s, b, three, nh, dh = qkv.shape
    assert three == 3
    tq = _pick_tile(s, q_tile)
    tkv = _pick_tile(s, kv_tile)

    kernel = functools.partial(_flash_attn_kernel, num_heads=nh,
                               tq=tq, tkv=tkv, causal=causal)

    q_spec = pl.BlockSpec((tq, None, None, nh, dh),
                          lambda bi, qi, ki: (qi, bi, 0, 0, 0))

    if causal:
        # Clamp the K/V block index once the whole tile is above the diagonal:
        # repeated block indices elide the HBM DMA, pl.when skips the compute.
        def kv_idx(sel):
            def idx(bi, qi, ki):
                last_needed = ((qi + 1) * tq - 1) // tkv
                return (jnp.minimum(ki, last_needed), bi, sel, 0, 0)
            return idx
    else:
        def kv_idx(sel):
            return lambda bi, qi, ki: (ki, bi, sel, 0, 0)

    k_spec = pl.BlockSpec((tkv, None, None, nh, dh), kv_idx(1))
    v_spec = pl.BlockSpec((tkv, None, None, nh, dh), kv_idx(2))

    in_specs = [q_spec, k_spec, v_spec]
    args = [qkv, qkv, qkv]
    if not causal:
        mask_spec = pl.BlockSpec((None, None, tq, tkv),
                                 lambda bi, qi, ki: (bi, 0, qi, ki))
        in_specs = [mask_spec] + in_specs
        args = [attention_mask.astype(jnp.bfloat16)] + args

    return pl.pallas_call(
        kernel,
        out_shape=jax.ShapeDtypeStruct((s, b, nh, dh), jnp.bfloat16),
        grid=(b, s // tq, s // tkv),
        in_specs=in_specs,
        out_specs=pl.BlockSpec((tq, None, nh, dh),
                               lambda bi, qi, ki: (qi, bi, 0, 0)),
        scratch_shapes=[
            pltpu.VMEM((nh, tq, 1), jnp.float32),          # running max
            pltpu.VMEM((nh, tq, 1), jnp.float32),          # running denominator
            pltpu.VMEM((nh, tq, dh), jnp.float32),         # un-normalized context
        ],
        compiler_params=pltpu.CompilerParams(
            dimension_semantics=("parallel", "parallel", "arbitrary"),
            vmem_limit_bytes=_vmem_limit_bytes(),
        ),
    )(*args)


# ------------------------------- full forward --------------------------------
def _prepare_qkv_weights(w_qkv, b_qkv, num_heads, head_dim):
    """Reorder packed-QKV columns from Megatron's per-head [q|k|v] layout to
    [q-heads | k-heads | v-heads] slabs and fold 1/sqrt(dh) into the Q slab
    (weights AND bias). One-time wrapper transform, zero kernel cost."""
    K, N = w_qkv.shape
    w = w_qkv.reshape(K, num_heads, 3, head_dim)
    w = jnp.transpose(w, (0, 2, 1, 3)).reshape(K, N)
    b = b_qkv.reshape(num_heads, 3, head_dim)
    b = jnp.transpose(b, (1, 0, 2)).reshape(N)
    sm_scale = 1.0 / math.sqrt(head_dim)
    qn = num_heads * head_dim
    col_scale = jnp.concatenate([
        jnp.full((qn,), sm_scale, dtype=w.dtype),
        jnp.ones((N - qn,), dtype=w.dtype)])
    return w * col_scale[None, :], b * col_scale


def parallel_self_attention(hidden_states, attention_mask,
                            w_qkv, b_qkv, w_dense, b_dense, num_heads,
                            *, causal=False):
    """hidden_states: [s, b, h]; attention_mask: bool [b, 1, s, s] -> [s, b, h].
    If causal=True the mask is generated in-kernel (attention_mask ignored)."""
    s, b, h = hidden_states.shape
    assert h % num_heads == 0
    dh = h // num_heads

    w_qkv_p, b_qkv_p = _prepare_qkv_weights(w_qkv, b_qkv, num_heads, dh)

    # query_key_value (ColumnParallelLinear, world_size=1) -> bf16 activations.
    mixed = pallas_linear(hidden_states.reshape(s * b, h), w_qkv_p, b_qkv_p,
                          out_dtype=jnp.bfloat16)                # [s*b, 3h]
    qkv = mixed.reshape(s, b, 3, num_heads, dh)                  # free reshape

    ctx = pallas_flash_attention(qkv, attention_mask, causal=causal)  # [s,b,nh,dh]

    # TODO(synk): attention_dropout omitted (treated as p=0 / eval mode).

    # dense (RowParallelLinear, world_size=1); [s, b, nh, dh] -> [s*b, h] is free.
    out = pallas_linear(ctx.reshape(s * b, h), w_dense, b_dense,
                        out_dtype=hidden_states.dtype)
    return out.reshape(s, b, h)


# ------------------------------ reference (JAX) -------------------------------
def _reference(hidden, mask, w_qkv, b_qkv, w_dense, b_dense, num_heads):
    s, b, h = hidden.shape
    dh = h // num_heads
    mixed = hidden.reshape(s * b, h) @ w_qkv + b_qkv
    mixed = mixed.reshape(s, b, num_heads, 3 * dh)
    q, k, v = jnp.split(mixed, 3, axis=-1)
    q = jnp.transpose(q, (1, 2, 0, 3))
    k = jnp.transpose(k, (1, 2, 0, 3))
    v = jnp.transpose(v, (1, 2, 0, 3))
    scores = jnp.einsum("bnqd,bnkd->bnqk", q, k) / math.sqrt(dh)
    scores = jnp.where(mask, -10000.0, scores)
    probs = jax.nn.softmax(scores, axis=-1)
    ctx = jnp.einsum("bnqk,bnkd->bnqd", probs, v)
    ctx = jnp.transpose(ctx, (2, 0, 1, 3)).reshape(s, b, h)
    return (ctx.reshape(s * b, h) @ w_dense + b_dense).reshape(s, b, h)


if __name__ == "__main__":
    # small shapes: seq=8, batch=2, hidden=32, heads=4 (head_dim=8)
    s, b, h, nh = 8, 2, 32, 4

    key = jax.random.PRNGKey(0)
    k1, k2, k3, k4, k5 = jax.random.split(key, 5)

    hidden = jax.random.normal(k1, (s, b, h), dtype=jnp.float32)
    # causal mask: True above the diagonal (future positions masked out)
    causal_mask = jnp.triu(jnp.ones((s, s), dtype=bool), k=1)
    attention_mask = jnp.broadcast_to(causal_mask, (b, 1, s, s))

    w_qkv = 0.02 * jax.random.normal(k2, (h, 3 * h), dtype=jnp.float32)
    b_qkv = 0.02 * jax.random.normal(k3, (3 * h,), dtype=jnp.float32)
    w_dense = 0.02 * jax.random.normal(k4, (h, h), dtype=jnp.float32)
    b_dense = 0.02 * jax.random.normal(k5, (h,), dtype=jnp.float32)

    ref = _reference(hidden, attention_mask, w_qkv, b_qkv, w_dense, b_dense, nh)

    # general-mask path (arbitrary attention_mask streamed as bf16 0/1 tiles)
    out_masked = parallel_self_attention(
        hidden, attention_mask, w_qkv, b_qkv, w_dense, b_dense, nh, causal=False)
    out_masked = jax.block_until_ready(out_masked)

    # causal fast path (mask generated in-kernel, masked kv tiles skipped)
    out_causal = parallel_self_attention(
        hidden, attention_mask, w_qkv, b_qkv, w_dense, b_dense, nh, causal=True)
    out_causal = jax.block_until_ready(out_causal)

    assert out_masked.shape == (s, b, h) and out_causal.shape == (s, b, h)
    # bf16 MXU operands (f32 accumulation / f32 softmax) -> loosened tolerance.
    err_m = float(jnp.max(jnp.abs(out_masked - ref)))
    err_c = float(jnp.max(jnp.abs(out_causal - ref)))
    assert jnp.allclose(out_masked, ref, rtol=2e-2, atol=2e-2), f"masked err {err_m}"
    assert jnp.allclose(out_causal, ref, rtol=2e-2, atol=2e-2), f"causal err {err_c}"

    print("KERNEL_OK")
</pallas_src>

<mosaic_0001>
module attributes {stable_mosaic.version = 11 : i64} {
  func.func @_linear_kernel(%arg0: i32, %arg1: i32, %arg2: i32, %arg3: memref<16x32xbf16, #tpu.memory_space<vmem>>, %arg4: memref<32x96xbf16, #tpu.memory_space<vmem>>, %arg5: memref<1x96xf32, #tpu.memory_space<vmem>>, %arg6: memref<16x96xbf16, #tpu.memory_space<vmem>>, %arg7: memref<16x96xf32, #tpu.memory_space<vmem>>) attributes {dimension_semantics = [#tpu.dimension_semantics<parallel>, #tpu.dimension_semantics<parallel>, #tpu.dimension_semantics<arbitrary>], iteration_bounds = array<i64: 1, 1, 1>, scalar_prefetch = 0 : i64, scratch_operands = 1 : i64, tpu.core_type = #tpu.core_type<tc>, window_params = [{transform_indices = @transform_0, window_bounds = array<i64: 16, 32>}, {transform_indices = @transform_1, window_bounds = array<i64: 32, 96>}, {transform_indices = @transform_2, window_bounds = array<i64: 1, 96>}, {transform_indices = @transform_3, window_bounds = array<i64: 16, 96>}]} {
    %c0_i32 = arith.constant 0 : i32
    %0 = arith.cmpi eq, %arg2, %c0_i32 : i32
    %1 = arith.extui %0 : i1 to i32
    %c0_i32_0 = arith.constant 0 : i32
    %2 = arith.cmpi ne, %1, %c0_i32_0 : i32
    scf.if %2 {
      %cst_10 = arith.constant 0.000000e+00 : f32
      %12 = vector.broadcast %cst_10 : f32 to vector<16x96xf32>
      %c0_11 = arith.constant 0 : index
      %c0_12 = arith.constant 0 : index
      %13 = vector.load %arg7[%c0_11, %c0_12] : memref<16x96xf32, #tpu.memory_space<vmem>>, vector<16x96xf32>
      tpu.vector_store %arg7[%c0_11, %c0_12], %12 {strides = array<i32>} : memref<16x96xf32, #tpu.memory_space<vmem>>, vector<16x96xf32>,
    } else {
    }
    %c0 = arith.constant 0 : index
    %c0_1 = arith.constant 0 : index
    %3 = vector.load %arg7[%c0, %c0_1] : memref<16x96xf32, #tpu.memory_space<vmem>>, vector<16x96xf32>
    %c0_2 = arith.constant 0 : index
    %c0_3 = arith.constant 0 : index
    %4 = vector.load %arg3[%c0_2, %c0_3] : memref<16x32xbf16, #tpu.memory_space<vmem>>, vector<16x32xbf16>
    %c0_4 = arith.constant 0 : index
    %c0_5 = arith.constant 0 : index
    %5 = vector.load %arg4[%c0_4, %c0_5] : memref<32x96xbf16, #tpu.memory_space<vmem>>, vector<32x96xbf16>
    %cst = arith.constant dense<0.000000e+00> : vector<16x96xf32>
    %6 = tpu.matmul %4, %5, %cst {dimension_numbers = #tpu.dot_dimension_numbers<[1], [0], [0], [1], [0, 0, 1, 1], [], []>} : vector<16x32xbf16>, vector<32x96xbf16>, vector<16x96xf32> -> vector<16x96xf32>
    %7 = arith.addf %3, %6 : vector<16x96xf32>
    %c0_6 = arith.constant 0 : index
    %c0_7 = arith.constant 0 : index
    %8 = vector.load %arg7[%c0_6, %c0_7] : memref<16x96xf32, #tpu.memory_space<vmem>>, vector<16x96xf32>
    tpu.vector_store %arg7[%c0_6, %c0_7], %7 {strides = array<i32>} : memref<16x96xf32, #tpu.memory_space<vmem>>, vector<16x96xf32>,
    %c0_i32_8 = arith.constant 0 : i32
    %9 = arith.cmpi eq, %arg2, %c0_i32_8 : i32
    %10 = arith.extui %9 : i1 to i32
    %c0_i32_9 = arith.constant 0 : i32
    %11 = arith.cmpi ne, %10, %c0_i32_9 : i32
    scf.if %11 {
      %c0_10 = arith.constant 0 : index
      %c0_11 = arith.constant 0 : index
      %12 = vector.load %arg7[%c0_10, %c0_11] : memref<16x96xf32, #tpu.memory_space<vmem>>, vector<16x96xf32>
      %c0_12 = arith.constant 0 : index
      %c0_13 = arith.constant 0 : index
      %13 = vector.load %arg5[%c0_12, %c0_13] : memref<1x96xf32, #tpu.memory_space<vmem>>, vector<1x96xf32>
      %14 = vector.broadcast %13 : vector<1x96xf32> to vector<16x96xf32>
      %15 = arith.addf %12, %14 : vector<16x96xf32>
      %16 = arith.truncf %15 : vector<16x96xf32> to vector<16x96xbf16>
      %c0_14 = arith.constant 0 : index
      %c0_15 = arith.constant 0 : index
      %17 = vector.load %arg6[%c0_14, %c0_15] : memref<16x96xbf16, #tpu.memory_space<vmem>>, vector<16x96xbf16>
      tpu.vector_store %arg6[%c0_14, %c0_15], %16 {strides = array<i32>} : memref<16x96xbf16, #tpu.memory_space<vmem>>, vector<16x96xbf16>,
    } else {
    }
    return
  }
  func.func @transform_0(%arg0: i32, %arg1: i32, %arg2: i32) -> (i32, i32) {
    %c0_i32 = arith.constant 0 : i32
    return %arg0, %arg2 : i32, i32
  }
  func.func @transform_1(%arg0: i32, %arg1: i32, %arg2: i32) -> (i32, i32) {
    %c0_i32 = arith.constant 0 : i32
    return %arg2, %arg1 : i32, i32
  }
  func.func @transform_2(%arg0: i32, %arg1: i32, %arg2: i32) -> (i32, i32) {
    %c0_i32 = arith.constant 0 : i32
    %c0_i32_0 = arith.constant 0 : i32
    return %c0_i32, %arg1 : i32, i32
  }
  func.func @transform_3(%arg0: i32, %arg1: i32, %arg2: i32) -> (i32, i32) {
    %c0_i32 = arith.constant 0 : i32
    return %arg0, %arg1 : i32, i32
  }
}

</mosaic_0001>

<llo_original>
// kernel: tpu_custom_call.1
$region0: #{tpu_custom_call.1}
  #allocation0 [shape = 'u32[]', space=smem, size = 0x4, offset = 0x4, fixed_abs, tag = 'smem constant byte address 0x4 - core index']
  #allocation1 [shape = 'u32[144,128]{1,0:T(1,128)}', space=vmem, size = 0x12000, scoped, tag = 'internal scratch']
  #allocation2 [shape = 'f32[16,96]{1,0:T(8,128)}', space=vmem, size = 0x2000, scoped, tag = 'scratch operand']
  %s0 = inlined_call_operand.hbm [shape: bf16[16,32], index: 0, kind: input, shape index: {}]
  %s1 = inlined_call_operand.hbm [shape: bf16[32,96], index: 1, kind: input, shape index: {}]
  %s2 = inlined_call_operand.vmem [shape: f32[1,96], index: 2, kind: input, shape index: {}]
  %s3 = inlined_call_operand.hbm [shape: bf16[16,96], index: 3, kind: output, shape index: {}]
  %s4 = sld [smem:[#allocation0]]
  $region38: #{tpu_custom_call.1} parent=0
    _
  %s6 = ssub.s32 1, %s4
  %s7 = scalar_select 0, %s6, %s4
  $region1: #{tpu_custom_call.1} parent=0
    #allocation3 [shape = 'u8[4096]{0}', space=vmem, size = 0x1000, scoped, tag = 'input window, operand 0, single buffered']
    #allocation4 [shape = 's32[1]{0}', space=sflag, size = 0x4, scoped, tag = 'scoped memory for tpu_custom_call.1']
    #allocation5 [shape = 's32[1]{0}', space=sflag, size = 0x4, scoped, tag = 'scoped memory for tpu_custom_call.1']
    #allocation6 [shape = 'u8[8192]{0}', space=vmem, size = 0x2000, scoped, tag = 'input window, operand 1, single buffered']
    #allocation7 [shape = 's32[1]{0}', space=sflag, size = 0x4, scoped, tag = 'scoped memory for tpu_custom_call.1']
    #allocation8 [shape = 'u8[4096]{0}', space=vmem, size = 0x1000, scoped, tag = 'output window, operand 0, single buffered']
    %8 = vsyncpa [#allocation4], 0
    %9 = vsyncpa [#allocation7], 0
    %10 = vsyncpa [#allocation5], 0
    // Predicated region
    $region2: #{tpu_custom_call.1} parent=1 // pred_check
      _
    $region3: #{tpu_custom_call.1} parent=1 // pred_check_branch
      %12 = sbr.rel (0) target = $region5
    $region4: #{tpu_custom_call.1} parent=1 // pred_region
      %s14 = ssub.s32 128, 128
      %15 = vsyncadd [#allocation4], %s14
      %s16 = sshll.u32 [#allocation3], 4
      %s17 = int_to_ptr.vmem [resolvable:$true] %s16
      %22 = dma.hbm_to_vmem [thread:$0]  %s0, 128, %s17, [#allocation4], 64, 64, 4
    $region5: #{tpu_custom_call.1} parent=1 // pred_fallthru
      _
    // Predicated region
    $region6: #{tpu_custom_call.1} parent=1 // pred_check
      _
    $region7: #{tpu_custom_call.1} parent=1 // pred_check_branch
      %24 = sbr.rel (0) target = $region9
    $region8: #{tpu_custom_call.1} parent=1 // pred_region
      %s26 = ssub.s32 256, 256
      %27 = vsyncadd [#allocation7], %s26
      %s28 = sshll.u32 [#allocation6], 4
      %s29 = int_to_ptr.vmem [resolvable:$true] %s28
      %34 = dma.hbm_to_vmem [thread:$0]  %s1, 256, %s29, [#allocation7], 64, 64, 4
    $region9: #{tpu_custom_call.1} parent=1 // pred_fallthru
      _
    // Predicated region
    $region10: #{tpu_custom_call.1} parent=1 // pred_check
      _
    $region11: #{tpu_custom_call.1} parent=1 // pred_check_branch
      %36 = sbr.rel (0) target = $region13
    $region12: #{tpu_custom_call.1} parent=1 // pred_region
      _
    $region13: #{tpu_custom_call.1} parent=1 // pred_fallthru
      _
    // Predicated region
    $region14: #{tpu_custom_call.1} parent=1 // pred_check
      _
    $region15: #{tpu_custom_call.1} parent=1 // pred_check_branch
      %38 = sbr.rel (0) target = $region17
    $region16: #{tpu_custom_call.1} parent=1 // pred_region
      %39 = dma.done [#allocation4], 128
    $region17: #{tpu_custom_call.1} parent=1 // pred_fallthru
      _
    // Predicated region
    $region18: #{tpu_custom_call.1} parent=1 // pred_check
      _
    $region19: #{tpu_custom_call.1} parent=1 // pred_check_branch
      %41 = sbr.rel (0) target = $region21
    $region20: #{tpu_custom_call.1} parent=1 // pred_region
      %42 = dma.done [#allocation7], 256
    $region21: #{tpu_custom_call.1} parent=1 // pred_fallthru
      _
    %p44 = scmp.eq.s32.totalorder 0, 0
    // Predicated region
    $region22: #{tpu_custom_call.1} parent=1 // pred_check
      %p45 = pneg %p44
    $region23: #{tpu_custom_call.1} parent=1 // pred_check_branch
      %47 = sbr.rel (%p45) target = $region25
    $region24: #{tpu_custom_call.1} parent=1 // pred_region
      %vm48 = vcmask 785408
      %49 = vst.msk [vmem:[#allocation2] sm:$0xff] %vm48, 0.0
      %50 = vst.msk [vmem:[#allocation2 + $0x8] sm:$0xff] %vm48, 0.0
    $region25: #{tpu_custom_call.1} parent=1 // pred_fallthru
      _
    %v51 = vld [vmem:[#allocation2] sm:$0xff]
    %v52 = vld [vmem:[#allocation2 + $0x8] sm:$0xff]
    %v53 = vld [vmem:[#allocation3] sm:$0xf]
    %v54 = vld [vmem:[#allocation3 + $0x4] sm:$0xf]
    %v55 = vld [vmem:[#allocation6] sm:$0xf]
    %v56 = vld [vmem:[#allocation6 + $0x4] sm:$0xf]
    %v57 = vld [vmem:[#allocation6 + $0x8] sm:$0xf]
    %v58 = vld [vmem:[#allocation6 + $0xc] sm:$0xf]
    %v61 = vunpack.c.l.b16 %v53
    %v62 = vunpack.c.l.b16 %v54
    %v63 = vpack.c.b16 %v62, %v61
    %v68 = vunpack.c.l.b16 %v55
    %v69 = vunpack.c.l.b16 %v56
    %v70 = vunpack.c.l.b16 %v57
    %v71 = vunpack.c.l.b16 %v58
    %v72 = vpack.c.b16 %v69, %v68
    %v73 = vpack.c.b16 %v71, %v70
    %vm76 = vcmask 261120
    %v78 = vsel %vm76, %v63, 0
    %80 = vmatprep.subr.bf16.mxu0 0
    %81 = vmatpush1.bf16.msra.mxu0 %v72
    %82 = vmatprep.subr.bf16.mxu0 0
    %83 = vmatpush1.bf16.msra.mxu0 %v73
    %84 = vmatprep.subr.bf16.mxu0 0
    %85 = vmatpush1.bf16.msra.mxu0 0
    %86 = vmatprep.subr.bf16.mxu0 0
    %87 = vmatpush1.bf16.msra.mxu0 0
    %88 = vmatprep.subr.bf16.mxu0 0
    %89 = vmatpush1.bf16.msra.mxu0 0
    %90 = vmatprep.subr.bf16.mxu0 0
    %91 = vmatpush1.bf16.msra.mxu0 0
    %92 = vmatprep.subr.bf16.mxu0 0
    %93 = vmatpush1.bf16.msra.mxu0 0
    %94 = vmatprep.subr.bf16.mxu0 0
    %95 = vmatpush1.bf16.msra.mxu0 0
    %96 = vmatprep.subr.bf16.mxu0 0
    %97 = vmatpush1.bf16.msra.mxu0 0
    %98 = vmatprep.subr.bf16.mxu0 0
    %99 = vmatpush1.bf16.msra.mxu0 0
    %100 = vmatprep.subr.bf16.mxu0 0
    %101 = vmatpush1.bf16.msra.mxu0 0
    %102 = vmatprep.subr.bf16.mxu0 0
    %103 = vmatpush1.bf16.msra.mxu0 0
    %104 = vmatprep.subr.bf16.mxu0 0
    %105 = vmatpush1.bf16.msra.mxu0 0
    %106 = vmatprep.subr.bf16.mxu0 0
    %107 = vmatpush1.bf16.msra.mxu0 0
    %108 = vmatprep.subr.bf16.mxu0 0
    %109 = vmatpush1.bf16.msra.mxu0 0
    %110 = vmatprep.subr.bf16.mxu0 0
    %111 = vmatpush1.bf16.msra.mxu0 0
    %112 = vmatprep.mubr.bf16.mxu0 0
    %113 = vmatmul.mubr.bf16.gmra.mrb[0].mxu0 %v78
    %v114 = vpop.f32.mrb[0].mxu0
    %v115 = vadd.f32 0.0, %v114
    %v116 = vpop.f32.mrb[0].mxu0
    %v117 = vpop.f32.mrb[0].mxu0
    %v118 = vadd.f32 0.0, %v117
    %v119 = vpop.f32.mrb[0].mxu0
    %120 = vdwg.mxu0
    %v121 = vadd.f32 %v51, %v115
    %v122 = vadd.f32 %v52, %v118
    %vm123 = vcmask 785408
    %124 = vst.msk [vmem:[#allocation2] sm:$0xff] %vm123, %v121
    %125 = vst.msk [vmem:[#allocation2 + $0x8] sm:$0xff] %vm123, %v122
    // Predicated region
    $region26: #{tpu_custom_call.1} parent=1 // pred_check
      %p126 = pneg %p44
    $region27: #{tpu_custom_call.1} parent=1 // pred_check_branch
      %128 = sbr.rel (%p126) target = $region29
    $region28: #{tpu_custom_call.1} parent=1 // pred_region
      %v129 = vld [vmem:[#allocation2] sm:$0xff]
      %v130 = vld [vmem:[#allocation2 + $0x8] sm:$0xff]
      %v131 = vld [vmem:[%s2] sm:$0x1]
      %v133 = vlaneseq
      %v134 = vshrl.u32 %v133, 7
      %v135 = vsub.s32 0, %v134
      %v136 = vrot.slane %v131, %v135
      %v138 = vadd.f32 %v129, %v136
      %v139 = vadd.f32 %v130, %v136
      %v140 = vpack.c.bf16 %v139, %v138
      %v142 = vunpack.c.l.b16 %v140
      %v143 = vunpack.c.h.b16 %v140
      %v144 = vpack.c.b16 %v142, %v142
      %v145 = vpack.c.b16 %v143, %v143
      %vm148 = vcmask 781312
      %149 = vst.msk [vmem:[#allocation8] sm:$0xf] %vm148, %v144
      %150 = vst.msk [vmem:[#allocation8 + $0x4] sm:$0xf] %vm148, %v145
    $region29: #{tpu_custom_call.1} parent=1 // pred_fallthru
      _
    // Predicated region
    $region30: #{tpu_custom_call.1} parent=1 // pred_check
      _
    $region31: #{tpu_custom_call.1} parent=1 // pred_check_branch
      %152 = sbr.rel (0) target = $region33
    $region32: #{tpu_custom_call.1} parent=1 // pred_region
      %s154 = ssub.s32 128, 128
      %155 = vsyncadd [#allocation5], %s154
      %s156 = sshll.u32 [#allocation8], 4
      %s157 = int_to_ptr.vmem [resolvable:$true] %s156
      %162 = dma.vmem_to_hbm [thread:$0]  %s157, 128, %s3, [#allocation5], 64, 64, 4
    $region33: #{tpu_custom_call.1} parent=1 // pred_fallthru
      _
    // Predicated region
    $region34: #{tpu_custom_call.1} parent=1 // pred_check
      _
    $region35: #{tpu_custom_call.1} parent=1 // pred_check_branch
      %164 = sbr.rel (0) target = $region37
    $region36: #{tpu_custom_call.1} parent=1 // pred_region
      %165 = dma.done [#allocation5], 128
    $region37: #{tpu_custom_call.1} parent=1 // pred_fallthru
      _
    %166 = vsyncpa [#allocation4], 1
    %167 = vsyncpa [#allocation7], 1
    %168 = vsyncpa [#allocation5], 1

</llo_original>
